<compile_context>
chip_gen: v7x
topology: tpu7x:2x2x1
jax: 0.10.0
libtpu: 0.0.40
codegen_flags: <defaults>
</compile_context>

<pallas_src>
from functools import partial

import numpy as np
import jax
import jax.numpy as jnp
from jax.experimental import pallas as pl
from jax.experimental.pallas import tpu as pltpu


def _round_up(x, m):
    return (x + m - 1) // m * m


# ---------------------------------------------------------------------------
# Kernel: fused per-edge MLP (two batched MXU matmuls) + K-way max + ReLU
# ---------------------------------------------------------------------------
def pointnet_layer_kernel(feat_ref, w1_ref, b1_ref, w2_ref, b2_ref, out_ref,
                          *, k_slots, tn):
    """One node tile.

    feat_ref : [K*TN, Fp] bf16  edge features, slot-major within the tile
               (row s*TN + t holds slot s of node t).
    w1_ref   : [Fp, Hp] bf16,  b1_ref : [1, Hp] f32
    w2_ref   : [Hp, Cp] bf16,  b2_ref : [1, Cp] f32
    out_ref  : [TN, Cp]        out[t] = relu( max_s mlp(feat[s, t]) )
    """
    # One batched matmul per linear layer (all K slots at once -> good MXU cadence).
    h1 = jnp.dot(feat_ref[...], w1_ref[...],
                 preferred_element_type=jnp.float32) + b1_ref[...]
    h1 = jnp.maximum(h1, 0.0).astype(w2_ref.dtype)          # ReLU, back to bf16 for MXU
    msg = jnp.dot(h1, w2_ref[...],
                  preferred_element_type=jnp.float32) + b2_ref[...]   # [K*TN, Cp] f32
    # Max over the K slots: K-1 elementwise maximums over sublane-aligned [TN, Cp] slabs.
    acc = msg[0:tn]
    for s in range(1, k_slots):
        acc = jnp.maximum(acc, msg[s * tn:(s + 1) * tn])
    out_ref[...] = jnp.maximum(acc, 0.0).astype(out_ref.dtype)        # fused trailing ReLU


# ---------------------------------------------------------------------------
# One-time parameter preparation (padding + bf16 cast for the MXU)
# ---------------------------------------------------------------------------
def prepare_layer_params(w1, b1, w2, b2, compute_dtype=jnp.bfloat16):
    f_in, hid = w1.shape
    c_out = w2.shape[1]
    fp = _round_up(f_in, 8)        # contraction dim: 8-aligned only (no 128 HBM padding)
    hp = _round_up(hid, 128)       # hidden / second contraction: lane-dense
    cp = _round_up(c_out, 128)     # output: lane-dense, unmasked stores
    return {
        "w1": jnp.zeros((fp, hp), compute_dtype).at[:f_in, :hid].set(w1.astype(compute_dtype)),
        "b1": jnp.zeros((1, hp), jnp.float32).at[:, :hid].set(b1.astype(jnp.float32)[None, :]),
        "w2": jnp.zeros((hp, cp), compute_dtype).at[:hid, :c_out].set(w2.astype(compute_dtype)),
        "b2": jnp.zeros((1, cp), jnp.float32).at[:, :c_out].set(b2.astype(jnp.float32)[None, :]),
        "f_in": f_in,
        "c_out": c_out,
    }


def prepare_pointnet_params(params, compute_dtype=jnp.bfloat16):
    return {
        "conv1": prepare_layer_params(*params["conv1"], compute_dtype=compute_dtype),
        "conv2": prepare_layer_params(*params["conv2"], compute_dtype=compute_dtype),
    }


# ---------------------------------------------------------------------------
# Graph preprocessing: [2, E] edge_index -> fixed-degree neighbour table.
# max_degree is STATIC (host-provided) so shapes never depend on device values.
# Padded slots repeat the node's first real neighbour (max over duplicates is a
# no-op); degree-0 rows point at the node itself and are zeroed in the wrapper.
# ---------------------------------------------------------------------------
def build_neighbor_table(edge_index, num_nodes, max_degree):
    src = edge_index[0].astype(jnp.int32)
    dst = edge_index[1].astype(jnp.int32)
    order = jnp.argsort(dst)                        # group edges by destination node
    sdst = dst[order]
    ssrc = src[order]
    first = jnp.searchsorted(sdst, sdst, side="left").astype(jnp.int32)
    slot = jnp.arange(sdst.shape[0], dtype=jnp.int32) - first        # rank within group
    self_idx = jnp.arange(num_nodes, dtype=jnp.int32)
    nbr = jnp.tile(self_idx[:, None], (1, max_degree)).at[sdst, slot].set(ssrc)
    valid = jnp.zeros((num_nodes, max_degree), bool).at[sdst, slot].set(True)
    first_nbr = jnp.where(valid[:, 0], nbr[:, 0], self_idx)
    nbr = jnp.where(valid, nbr, first_nbr[:, None])   # pad slots = duplicate neighbour
    has_edge = valid.any(axis=1)
    return nbr, has_edge


# ---------------------------------------------------------------------------
# One PointNetLayer (MessagePassing, aggr='max', source->target) + trailing ReLU
# ---------------------------------------------------------------------------
def _pointnet_layer(h_pad, c_in, pos_pad, nbr_r, mask_pad, prep, *, tn, out_dtype):
    t_tiles, k, _ = nbr_r.shape
    np_ = t_tiles * tn
    cd = prep["w1"].dtype
    f_in = c_in + 3
    fp, hp = prep["w1"].shape
    cp = prep["w2"].shape[1]
    assert fp == _round_up(f_in, 8), (fp, f_in)

    # Build edge features directly in the kernel's (tile, slot, node, feature) layout:
    # one fused gather/sub/concat pass, no swapaxes / pad-copy of the big array.
    h_src = h_pad if h_pad.shape[1] == c_in else h_pad[:, :c_in]
    h_j = h_src[nbr_r].astype(cd)                                     # [T, K, tn, c_in]
    rel = (pos_pad[nbr_r] - pos_pad.reshape(t_tiles, 1, tn, 3)).astype(cd)   # [T, K, tn, 3]
    parts = [h_j, rel]
    if fp > f_in:
        parts.append(jnp.zeros((t_tiles, k, tn, fp - f_in), cd))
    feat = jnp.concatenate(parts, axis=-1).reshape(t_tiles * k * tn, fp)  # contiguous

    flops = 2 * k * np_ * (fp * hp + hp * cp)
    bytes_accessed = int(feat.size * feat.dtype.itemsize
                         + (fp * hp + hp * cp) * 2 + (hp + cp) * 4
                         + np_ * cp * jnp.dtype(out_dtype).itemsize)

    out = pl.pallas_call(
        partial(pointnet_layer_kernel, k_slots=k, tn=tn),
        out_shape=jax.ShapeDtypeStruct((np_, cp), out_dtype),
        grid=(t_tiles,),
        in_specs=[
            pl.BlockSpec((k * tn, fp), lambda i: (i, 0)),   # contiguous edge-feature slab
            pl.BlockSpec((fp, hp), lambda i: (0, 0)),       # weights pinned at block (0,0)
            pl.BlockSpec((1, hp), lambda i: (0, 0)),
            pl.BlockSpec((hp, cp), lambda i: (0, 0)),
            pl.BlockSpec((1, cp), lambda i: (0, 0)),
        ],
        out_specs=pl.BlockSpec((tn, cp), lambda i: (i, 0)),
        compiler_params=pltpu.CompilerParams(
            dimension_semantics=("parallel",),              # node tiles are independent
            vmem_limit_bytes=48 * 1024 * 1024,              # < v7x 64 MiB physical
        ),
        cost_estimate=pl.CostEstimate(flops=int(flops), transcendentals=0,
                                      bytes_accessed=bytes_accessed),
    )(feat, prep["w1"], prep["b1"], prep["w2"], prep["b2"])

    # PyG empty-segment max followed by .relu() -> 0 for nodes with no incoming edge.
    return jnp.where(mask_pad, out, jnp.zeros((), out_dtype))


# ---------------------------------------------------------------------------
# Full PointNet forward (conv1 + relu, conv2 + relu)
# ---------------------------------------------------------------------------
def pointnet_forward(pos, edge_index, batch, prepared_params, *, max_degree,
                     node_tile=512):
    # `batch` is unused by the reference forward; `print`/`.to(device)` are side effects.
    del batch
    n = pos.shape[0]
    c1 = prepared_params["conv1"]
    c2 = prepared_params["conv2"]

    # Node tile: big enough to amortize ~0.35us/step, capped so the in-kernel f32
    # intermediates ([K*TN, 128]) stay at a few MiB (v7x / v5e VMEM-safe).  Multiple
    # node tiles also keep v7x's second TensorCore busy via the "parallel" grid axis.
    tn_cap = max(8, (4096 // max_degree) // 8 * 8)
    tn = min(max(8, (node_tile // 8) * 8), tn_cap, _round_up(n, 8))
    np_ = _round_up(n, tn)
    t_tiles = np_ // tn

    # Shared graph preprocessing (same neighbour table for both convs).
    nbr, has_edge = build_neighbor_table(edge_index, n, max_degree)       # [N,K], [N]
    k = nbr.shape[1]
    # Pad node-indexed arrays to whole tiles; padded rows point at node 0 (finite
    # garbage, masked / sliced away).  Only this small int table gets transposed.
    nbr_r = jnp.zeros((np_, k), jnp.int32).at[:n].set(nbr)
    nbr_r = nbr_r.reshape(t_tiles, tn, k).transpose(0, 2, 1)              # [T, K, tn]
    pos_p = jnp.zeros((np_, 3), pos.dtype).at[:n].set(pos)
    mask_p = jnp.zeros((np_, 1), jnp.bool_).at[:n, 0].set(has_edge)

    # conv1: bf16 padded hand-off (next layer casts to bf16 anyway); conv2: f32 out.
    h = _pointnet_layer(pos_p, 3, pos_p, nbr_r, mask_p, c1, tn=tn,
                        out_dtype=jnp.bfloat16)
    h = _pointnet_layer(h, c1["c_out"], pos_p, nbr_r, mask_p, c2, tn=tn,
                        out_dtype=jnp.float32)
    return h[:n, :c2["c_out"]]                                            # [N, 64]


# ---------------------------------------------------------------------------
# Parameter init (PyTorch nn.Linear default init; weight stored as [fan_in, fan_out])
# ---------------------------------------------------------------------------
def init_linear(key, fan_in, fan_out):
    k1, k2 = jax.random.split(key)
    bound = 1.0 / float(fan_in) ** 0.5
    w = jax.random.uniform(k1, (fan_in, fan_out), jnp.float32, -bound, bound)
    b = jax.random.uniform(k2, (fan_out,), jnp.float32, -bound, bound)
    return w, b


def init_pointnet_params(key, in_feat=3, hidden=32, out_feat=64):
    k1, k2, k3, k4 = jax.random.split(key, 4)
    c1_w1, c1_b1 = init_linear(k1, in_feat + 3, hidden)
    c1_w2, c1_b2 = init_linear(k2, hidden, hidden)
    c2_w1, c2_b1 = init_linear(k3, hidden + 3, out_feat)
    c2_w2, c2_b2 = init_linear(k4, out_feat, out_feat)
    return {
        "conv1": (c1_w1, c1_b1, c1_w2, c1_b2),
        "conv2": (c2_w1, c2_b1, c2_w2, c2_b2),
    }


# ---------------------------------------------------------------------------
# Pure-JAX reference (mirrors the kernel's bf16-matmul / f32-accumulate numerics)
# ---------------------------------------------------------------------------
def _reference_layer(h, pos, edge_index, w1, b1, w2, b2, compute_dtype=jnp.bfloat16):
    src, dst = edge_index[0], edge_index[1]
    feat = jnp.concatenate([h[src], pos[src] - pos[dst]], axis=-1).astype(compute_dtype)
    h1 = jnp.dot(feat, w1.astype(compute_dtype), preferred_element_type=jnp.float32) + b1
    h1 = jnp.maximum(h1, 0.0).astype(compute_dtype)
    msg = jnp.dot(h1, w2.astype(compute_dtype), preferred_element_type=jnp.float32) + b2
    agg = jax.ops.segment_max(msg, dst, num_segments=pos.shape[0])
    return jnp.maximum(agg, 0.0)


if __name__ == "__main__":
    key = jax.random.PRNGKey(0)
    k_pos, k_params = jax.random.split(key)

    n_points = 8
    pos = jax.random.normal(k_pos, (n_points, 3), jnp.float32)

    # Ring graph + self-loops, with some edges dropped so degrees vary (3, 2, 0):
    # node 3 is isolated (tests empty-segment max -> 0), node 5 loses its self-loop.
    idx = np.arange(n_points)
    src_np = np.concatenate([idx, (idx + 1) % n_points, (idx - 1) % n_points])
    dst_np = np.concatenate([idx, idx, idx])
    keep = (dst_np != 3) & ~((dst_np == 5) & (src_np == 5))
    src_np, dst_np = src_np[keep], dst_np[keep]
    edge_index = jnp.asarray(np.stack([src_np, dst_np]), dtype=jnp.int32)   # [2, 20]
    batch = jnp.zeros((n_points,), jnp.int32)

    # Static max in-degree, computed ONCE on the host (no device sync in the model).
    max_degree = max(int(np.bincount(dst_np, minlength=n_points).max()), 1)

    params = init_pointnet_params(k_params, in_feat=3, hidden=32, out_feat=64)
    prepared = prepare_pointnet_params(params, compute_dtype=jnp.bfloat16)

    fwd = jax.jit(lambda p, ei, b: pointnet_forward(p, ei, b, prepared,
                                                    max_degree=max_degree))
    out = jax.block_until_ready(fwd(pos, edge_index, batch))
    assert out.shape == (n_points, 64), out.shape

    # Cross-check against a pure-JAX reference with matching bf16 MXU numerics.
    ref = _reference_layer(pos, pos, edge_index, *params["conv1"])
    ref = _reference_layer(ref, pos, edge_index, *params["conv2"])
    assert bool(jnp.all(jnp.isfinite(out))), "non-finite output"
    assert jnp.allclose(out, ref, rtol=3e-2, atol=3e-2), (
        "mismatch vs reference, max abs err = %s" % float(jnp.max(jnp.abs(out - ref))))

    print("KERNEL_OK")
</pallas_src>

<mosaic_0001>
module attributes {stable_mosaic.version = 11 : i64} {
  func.func @pointnet_layer_kernel(%arg0: i32, %arg1: memref<24x8xbf16, #tpu.memory_space<vmem>>, %arg2: memref<8x128xbf16, #tpu.memory_space<vmem>>, %arg3: memref<1x128xf32, #tpu.memory_space<vmem>>, %arg4: memref<128x128xbf16, #tpu.memory_space<vmem>>, %arg5: memref<1x128xf32, #tpu.memory_space<vmem>>, %arg6: memref<8x128xbf16, #tpu.memory_space<vmem>>) attributes {dimension_semantics = [#tpu.dimension_semantics<parallel>], iteration_bounds = array<i64: 1>, scalar_prefetch = 0 : i64, scratch_operands = 0 : i64, tpu.core_type = #tpu.core_type<tc>, window_params = [{transform_indices = @transform_0, window_bounds = array<i64: 24, 8>}, {pipeline_mode = #tpu.pipeline_mode<synchronous>, transform_indices = @transform_1, window_bounds = array<i64: 8, 128>}, {pipeline_mode = #tpu.pipeline_mode<synchronous>, transform_indices = @transform_2, window_bounds = array<i64: 1, 128>}, {pipeline_mode = #tpu.pipeline_mode<synchronous>, transform_indices = @transform_3, window_bounds = array<i64: 128, 128>}, {pipeline_mode = #tpu.pipeline_mode<synchronous>, transform_indices = @transform_4, window_bounds = array<i64: 1, 128>}, {transform_indices = @transform_5, window_bounds = array<i64: 8, 128>}]} {
    %c0 = arith.constant 0 : index
    %c0_0 = arith.constant 0 : index
    %0 = vector.load %arg1[%c0, %c0_0] : memref<24x8xbf16, #tpu.memory_space<vmem>>, vector<24x8xbf16>
    %c0_1 = arith.constant 0 : index
    %c0_2 = arith.constant 0 : index
    %1 = vector.load %arg2[%c0_1, %c0_2] : memref<8x128xbf16, #tpu.memory_space<vmem>>, vector<8x128xbf16>
    %cst = arith.constant dense<0.000000e+00> : vector<24x128xf32>
    %2 = tpu.matmul %0, %1, %cst {dimension_numbers = #tpu.dot_dimension_numbers<[1], [0], [0], [1], [0, 0, 1, 1], [], []>} : vector<24x8xbf16>, vector<8x128xbf16>, vector<24x128xf32> -> vector<24x128xf32>
    %c0_3 = arith.constant 0 : index
    %c0_4 = arith.constant 0 : index
    %3 = vector.load %arg3[%c0_3, %c0_4] : memref<1x128xf32, #tpu.memory_space<vmem>>, vector<1x128xf32>
    %4 = vector.broadcast %3 : vector<1x128xf32> to vector<24x128xf32>
    %5 = arith.addf %2, %4 : vector<24x128xf32>
    %cst_5 = arith.constant 0.000000e+00 : f32
    %6 = vector.broadcast %cst_5 : f32 to vector<24x128xf32>
    %7 = arith.maximumf %5, %6 : vector<24x128xf32>
    %8 = arith.truncf %7 : vector<24x128xf32> to vector<24x128xbf16>
    %c0_6 = arith.constant 0 : index
    %c0_7 = arith.constant 0 : index
    %9 = vector.load %arg4[%c0_6, %c0_7] : memref<128x128xbf16, #tpu.memory_space<vmem>>, vector<128x128xbf16>
    %cst_8 = arith.constant dense<0.000000e+00> : vector<24x128xf32>
    %10 = tpu.matmul %8, %9, %cst_8 {dimension_numbers = #tpu.dot_dimension_numbers<[1], [0], [0], [1], [0, 0, 1, 1], [], []>} : vector<24x128xbf16>, vector<128x128xbf16>, vector<24x128xf32> -> vector<24x128xf32>
    %c0_9 = arith.constant 0 : index
    %c0_10 = arith.constant 0 : index
    %11 = vector.load %arg5[%c0_9, %c0_10] : memref<1x128xf32, #tpu.memory_space<vmem>>, vector<1x128xf32>
    %12 = vector.broadcast %11 : vector<1x128xf32> to vector<24x128xf32>
    %13 = arith.addf %10, %12 : vector<24x128xf32>
    %14 = vector.extract_strided_slice %13 {offsets = [0, 0], sizes = [8, 128], strides = [1, 1]} : vector<24x128xf32> to vector<8x128xf32>
    %15 = vector.extract_strided_slice %13 {offsets = [8, 0], sizes = [8, 128], strides = [1, 1]} : vector<24x128xf32> to vector<8x128xf32>
    %16 = arith.maximumf %14, %15 : vector<8x128xf32>
    %17 = vector.extract_strided_slice %13 {offsets = [16, 0], sizes = [8, 128], strides = [1, 1]} : vector<24x128xf32> to vector<8x128xf32>
    %18 = arith.maximumf %16, %17 : vector<8x128xf32>
    %cst_11 = arith.constant 0.000000e+00 : f32
    %19 = vector.broadcast %cst_11 : f32 to vector<8x128xf32>
    %20 = arith.maximumf %18, %19 : vector<8x128xf32>
    %21 = arith.truncf %20 : vector<8x128xf32> to vector<8x128xbf16>
    %c0_12 = arith.constant 0 : index
    %c0_13 = arith.constant 0 : index
    %22 = vector.load %arg6[%c0_12, %c0_13] : memref<8x128xbf16, #tpu.memory_space<vmem>>, vector<8x128xbf16>
    tpu.vector_store %arg6[%c0_12, %c0_13], %21 {strides = array<i32>} : memref<8x128xbf16, #tpu.memory_space<vmem>>, vector<8x128xbf16>,
    return
  }
  func.func @transform_0(%arg0: i32) -> (i32, i32) {
    %c0_i32 = arith.constant 0 : i32
    %c0_i32_0 = arith.constant 0 : i32
    return %arg0, %c0_i32 : i32, i32
  }
  func.func @transform_1(%arg0: i32) -> (i32, i32) {
    %c0_i32 = arith.constant 0 : i32
    %c0_i32_0 = arith.constant 0 : i32
    %c0_i32_1 = arith.constant 0 : i32
    return %c0_i32, %c0_i32_0 : i32, i32
  }
  func.func @transform_2(%arg0: i32) -> (i32, i32) {
    %c0_i32 = arith.constant 0 : i32
    %c0_i32_0 = arith.constant 0 : i32
    %c0_i32_1 = arith.constant 0 : i32
    return %c0_i32, %c0_i32_0 : i32, i32
  }
  func.func @transform_3(%arg0: i32) -> (i32, i32) {
    %c0_i32 = arith.constant 0 : i32
    %c0_i32_0 = arith.constant 0 : i32
    %c0_i32_1 = arith.constant 0 : i32
    return %c0_i32, %c0_i32_0 : i32, i32
  }
  func.func @transform_4(%arg0: i32) -> (i32, i32) {
    %c0_i32 = arith.constant 0 : i32
    %c0_i32_0 = arith.constant 0 : i32
    %c0_i32_1 = arith.constant 0 : i32
    return %c0_i32, %c0_i32_0 : i32, i32
  }
  func.func @transform_5(%arg0: i32) -> (i32, i32) {
    %c0_i32 = arith.constant 0 : i32
    %c0_i32_0 = arith.constant 0 : i32
    return %arg0, %c0_i32 : i32, i32
  }
}

module attributes {stable_mosaic.version = 11 : i64} {
  func.func @pointnet_layer_kernel(%arg0: i32, %arg1: memref<24x40xbf16, #tpu.memory_space<vmem>>, %arg2: memref<40x128xbf16, #tpu.memory_space<vmem>>, %arg3: memref<1x128xf32, #tpu.memory_space<vmem>>, %arg4: memref<128x128xbf16, #tpu.memory_space<vmem>>, %arg5: memref<1x128xf32, #tpu.memory_space<vmem>>, %arg6: memref<8x128xf32, #tpu.memory_space<vmem>>) attributes {dimension_semantics = [#tpu.dimension_semantics<parallel>], iteration_bounds = array<i64: 1>, scalar_prefetch = 0 : i64, scratch_operands = 0 : i64, tpu.core_type = #tpu.core_type<tc>, window_params = [{transform_indices = @transform_0, window_bounds = array<i64: 24, 40>}, {pipeline_mode = #tpu.pipeline_mode<synchronous>, transform_indices = @transform_1, window_bounds = array<i64: 40, 128>}, {pipeline_mode = #tpu.pipeline_mode<synchronous>, transform_indices = @transform_2, window_bounds = array<i64: 1, 128>}, {pipeline_mode = #tpu.pipeline_mode<synchronous>, transform_indices = @transform_3, window_bounds = array<i64: 128, 128>}, {pipeline_mode = #tpu.pipeline_mode<synchronous>, transform_indices = @transform_4, window_bounds = array<i64: 1, 128>}, {transform_indices = @transform_5, window_bounds = array<i64: 8, 128>}]} {
    %c0 = arith.constant 0 : index
    %c0_0 = arith.constant 0 : index
    %0 = vector.load %arg1[%c0, %c0_0] : memref<24x40xbf16, #tpu.memory_space<vmem>>, vector<24x40xbf16>
    %c0_1 = arith.constant 0 : index
    %c0_2 = arith.constant 0 : index
    %1 = vector.load %arg2[%c0_1, %c0_2] : memref<40x128xbf16, #tpu.memory_space<vmem>>, vector<40x128xbf16>
    %cst = arith.constant dense<0.000000e+00> : vector<24x128xf32>
    %2 = tpu.matmul %0, %1, %cst {dimension_numbers = #tpu.dot_dimension_numbers<[1], [0], [0], [1], [0, 0, 1, 1], [], []>} : vector<24x40xbf16>, vector<40x128xbf16>, vector<24x128xf32> -> vector<24x128xf32>
    %c0_3 = arith.constant 0 : index
    %c0_4 = arith.constant 0 : index
    %3 = vector.load %arg3[%c0_3, %c0_4] : memref<1x128xf32, #tpu.memory_space<vmem>>, vector<1x128xf32>
    %4 = vector.broadcast %3 : vector<1x128xf32> to vector<24x128xf32>
    %5 = arith.addf %2, %4 : vector<24x128xf32>
    %cst_5 = arith.constant 0.000000e+00 : f32
    %6 = vector.broadcast %cst_5 : f32 to vector<24x128xf32>
    %7 = arith.maximumf %5, %6 : vector<24x128xf32>
    %8 = arith.truncf %7 : vector<24x128xf32> to vector<24x128xbf16>
    %c0_6 = arith.constant 0 : index
    %c0_7 = arith.constant 0 : index
    %9 = vector.load %arg4[%c0_6, %c0_7] : memref<128x128xbf16, #tpu.memory_space<vmem>>, vector<128x128xbf16>
    %cst_8 = arith.constant dense<0.000000e+00> : vector<24x128xf32>
    %10 = tpu.matmul %8, %9, %cst_8 {dimension_numbers = #tpu.dot_dimension_numbers<[1], [0], [0], [1], [0, 0, 1, 1], [], []>} : vector<24x128xbf16>, vector<128x128xbf16>, vector<24x128xf32> -> vector<24x128xf32>
    %c0_9 = arith.constant 0 : index
    %c0_10 = arith.constant 0 : index
    %11 = vector.load %arg5[%c0_9, %c0_10] : memref<1x128xf32, #tpu.memory_space<vmem>>, vector<1x128xf32>
    %12 = vector.broadcast %11 : vector<1x128xf32> to vector<24x128xf32>
    %13 = arith.addf %10, %12 : vector<24x128xf32>
    %14 = vector.extract_strided_slice %13 {offsets = [0, 0], sizes = [8, 128], strides = [1, 1]} : vector<24x128xf32> to vector<8x128xf32>
    %15 = vector.extract_strided_slice %13 {offsets = [8, 0], sizes = [8, 128], strides = [1, 1]} : vector<24x128xf32> to vector<8x128xf32>
    %16 = arith.maximumf %14, %15 : vector<8x128xf32>
    %17 = vector.extract_strided_slice %13 {offsets = [16, 0], sizes = [8, 128], strides = [1, 1]} : vector<24x128xf32> to vector<8x128xf32>
    %18 = arith.maximumf %16, %17 : vector<8x128xf32>
    %cst_11 = arith.constant 0.000000e+00 : f32
    %19 = vector.broadcast %cst_11 : f32 to vector<8x128xf32>
    %20 = arith.maximumf %18, %19 : vector<8x128xf32>
    %c0_12 = arith.constant 0 : index
    %c0_13 = arith.constant 0 : index
    %21 = vector.load %arg6[%c0_12, %c0_13] : memref<8x128xf32, #tpu.memory_space<vmem>>, vector<8x128xf32>
    tpu.vector_store %arg6[%c0_12, %c0_13], %20 {strides = array<i32>} : memref<8x128xf32, #tpu.memory_space<vmem>>, vector<8x128xf32>,
    return
  }
  func.func @transform_0(%arg0: i32) -> (i32, i32) {
    %c0_i32 = arith.constant 0 : i32
    %c0_i32_0 = arith.constant 0 : i32
    return %arg0, %c0_i32 : i32, i32
  }
  func.func @transform_1(%arg0: i32) -> (i32, i32) {
    %c0_i32 = arith.constant 0 : i32
    %c0_i32_0 = arith.constant 0 : i32
    %c0_i32_1 = arith.constant 0 : i32
    return %c0_i32, %c0_i32_0 : i32, i32
  }
  func.func @transform_2(%arg0: i32) -> (i32, i32) {
    %c0_i32 = arith.constant 0 : i32
    %c0_i32_0 = arith.constant 0 : i32
    %c0_i32_1 = arith.constant 0 : i32
    return %c0_i32, %c0_i32_0 : i32, i32
  }
  func.func @transform_3(%arg0: i32) -> (i32, i32) {
    %c0_i32 = arith.constant 0 : i32
    %c0_i32_0 = arith.constant 0 : i32
    %c0_i32_1 = arith.constant 0 : i32
    return %c0_i32, %c0_i32_0 : i32, i32
  }
  func.func @transform_4(%arg0: i32) -> (i32, i32) {
    %c0_i32 = arith.constant 0 : i32
    %c0_i32_0 = arith.constant 0 : i32
    %c0_i32_1 = arith.constant 0 : i32
    return %c0_i32, %c0_i32_0 : i32, i32
  }
  func.func @transform_5(%arg0: i32) -> (i32, i32) {
    %c0_i32 = arith.constant 0 : i32
    %c0_i32_0 = arith.constant 0 : i32
    return %arg0, %c0_i32 : i32, i32
  }
}

</mosaic_0001>

<llo_original>
// kernel: custom-call.4
$region0: #{custom-call.4}
  %s0 = inlined_call_operand.vmem [shape: u32[20], index: 0, kind: output, shape index: {}]

// kernel: _lambda_.3
$region0: #{_lambda_.3}
  #allocation0 [shape = 'u32[]', space=smem, size = 0x4, offset = 0x4, fixed_abs, tag = 'smem constant byte address 0x4 - core index']
  #allocation1 [shape = 'u32[144,128]{1,0:T(1,128)}', space=vmem, size = 0x12000, scoped, tag = 'internal scratch']
  %s0 = inlined_call_operand.vmem [shape: bf16[24,40], index: 0, kind: input, shape index: {}]
  %s1 = inlined_call_operand.vmem [shape: bf16[40,128], index: 1, kind: input, shape index: {}]
  %s2 = inlined_call_operand.vmem [shape: f32[1,128], index: 2, kind: input, shape index: {}]
  %s3 = inlined_call_operand.vmem [shape: bf16[128,128], index: 3, kind: input, shape index: {}]
  %s4 = inlined_call_operand.vmem [shape: f32[1,128], index: 4, kind: input, shape index: {}]
  %s5 = inlined_call_operand.vmem [shape: f32[8,128], index: 5, kind: output, shape index: {}]
  %s6 = sld [smem:[#allocation0]]
  $region30: #{_lambda_.3} parent=0
    _
  %s8 = ssub.s32 1, %s6
  %s9 = scalar_select 0, %s8, %s6
  // Predicated region
  $region2: #{_lambda_.3} parent=0 // pred_check
    _
  $region3: #{_lambda_.3} parent=0 // pred_check_branch
    %11 = sbr.rel (0) target = $region5
  $region4: #{_lambda_.3} parent=0 // pred_region
    _
  $region5: #{_lambda_.3} parent=0 // pred_fallthru
    _
  // Predicated region
  $region6: #{_lambda_.3} parent=0 // pred_check
    _
  $region7: #{_lambda_.3} parent=0 // pred_check_branch
    %13 = sbr.rel (0) target = $region9
  $region8: #{_lambda_.3} parent=0 // pred_region
    _
  $region9: #{_lambda_.3} parent=0 // pred_fallthru
    _
  // Predicated region
  $region10: #{_lambda_.3} parent=0 // pred_check
    _
  $region11: #{_lambda_.3} parent=0 // pred_check_branch
    %15 = sbr.rel (0) target = $region13
  $region12: #{_lambda_.3} parent=0 // pred_region
    _
  $region13: #{_lambda_.3} parent=0 // pred_fallthru
    _
  // Predicated region
  $region14: #{_lambda_.3} parent=0 // pred_check
    _
  $region15: #{_lambda_.3} parent=0 // pred_check_branch
    %17 = sbr.rel (0) target = $region17
  $region16: #{_lambda_.3} parent=0 // pred_region
    _
  $region17: #{_lambda_.3} parent=0 // pred_fallthru
    _
  // Predicated region
  $region18: #{_lambda_.3} parent=0 // pred_check
    _
  $region19: #{_lambda_.3} parent=0 // pred_check_branch
    %19 = sbr.rel (0) target = $region21
  $region20: #{_lambda_.3} parent=0 // pred_region
    _
  $region21: #{_lambda_.3} parent=0 // pred_fallthru
    _
  %v21 = vld [vmem:[%s0] sm:$0xf]
  %v22 = vld [vmem:[%s0 + $0x4] sm:$0xf]
  %v23 = vld [vmem:[%s0 + $0x8] sm:$0xf]
  %v24 = vld [vmem:[%s1] sm:$0xf]
  %v25 = vld [vmem:[%s1 + $0x4] sm:$0xf]
  %v26 = vld [vmem:[%s1 + $0x8] sm:$0xf]
  %v27 = vld [vmem:[%s1 + $0xc] sm:$0xf]
  %v28 = vld [vmem:[%s1 + $0x10] sm:$0xf]
  %v29 = vld [vmem:[%s2] sm:$0x1]
  %v31 = vlaneseq
  %v32 = vshrl.u32 %v31, 7
  %v33 = vsub.s32 0, %v32
  %v34 = vrot.slane %v29, %v33
  %v39 = vunpack.c.l.b16 %v21
  %v40 = vunpack.c.l.b16 %v22
  %v41 = vunpack.c.l.b16 %v23
  %v42 = vpack.c.b16 %v40, %v39
  %v43 = vpack.c.b16 %v41, %v41
  %v49 = vunpack.c.l.b16 %v24
  %v50 = vunpack.c.l.b16 %v25
  %v51 = vunpack.c.l.b16 %v26
  %v52 = vunpack.c.l.b16 %v27
  %v53 = vunpack.c.l.b16 %v28
  %v54 = vpack.c.b16 %v50, %v49
  %v55 = vpack.c.b16 %v52, %v51
  %v56 = vpack.c.b16 %v53, %v53
  %vm59 = vcmask 326656
  %v61 = vsel %vm59, %v42, 0
  %v64 = vsel %vm59, %v43, 0
  %vm66 = vcmask 1043456
  %v68 = vsel %vm66, %v56, 0
  %70 = vmatprep.subr.bf16.mxu0 0
  %71 = vmatpush1.bf16.msra.mxu0 %v54
  %72 = vmatprep.subr.bf16.mxu0 0
  %73 = vmatpush1.bf16.msra.mxu0 %v55
  %74 = vmatprep.subr.bf16.mxu0 0
  %75 = vmatpush1.bf16.msra.mxu0 %v68
  %76 = vmatprep.subr.bf16.mxu0 0
  %77 = vmatpush1.bf16.msra.mxu0 0
  %78 = vmatprep.subr.bf16.mxu0 0
  %79 = vmatpush1.bf16.msra.mxu0 0
  %80 = vmatprep.subr.bf16.mxu0 0
  %81 = vmatpush1.bf16.msra.mxu0 0
  %82 = vmatprep.subr.bf16.mxu0 0
  %83 = vmatpush1.bf16.msra.mxu0 0
  %84 = vmatprep.subr.bf16.mxu0 0
  %85 = vmatpush1.bf16.msra.mxu0 0
  %86 = vmatprep.subr.bf16.mxu0 0
  %87 = vmatpush1.bf16.msra.mxu0 0
  %88 = vmatprep.subr.bf16.mxu0 0
  %89 = vmatpush1.bf16.msra.mxu0 0
  %90 = vmatprep.subr.bf16.mxu0 0
  %91 = vmatpush1.bf16.msra.mxu0 0
  %92 = vmatprep.subr.bf16.mxu0 0
  %93 = vmatpush1.bf16.msra.mxu0 0
  %94 = vmatprep.subr.bf16.mxu0 0
  %95 = vmatpush1.bf16.msra.mxu0 0
  %96 = vmatprep.subr.bf16.mxu0 0
  %97 = vmatpush1.bf16.msra.mxu0 0
  %98 = vmatprep.subr.bf16.mxu0 0
  %99 = vmatpush1.bf16.msra.mxu0 0
  %100 = vmatprep.subr.bf16.mxu0 0
  %101 = vmatpush1.bf16.msra.mxu0 0
  %102 = vmatprep.mubr.bf16.mxu0 0
  %103 = vmatmul.mubr.bf16.gmra.mrb[0].mxu0 %v61
  %v104 = vpop.f32.mrb[0].mxu0
  %v105 = vadd.f32 %v34, %v104
  %v106 = vpop.f32.mrb[0].mxu0
  %v107 = vpop.f32.mrb[0].mxu0
  %v108 = vadd.f32 %v34, %v107
  %v109 = vpop.f32.mrb[0].mxu0
  %110 = vmatprep.mubr.bf16.mxu0 0
  %111 = vmatmul.mubr.bf16.gmra.mrb[0].mxu0 %v64
  %v112 = vpop.f32.mrb[0].mxu0
  %v113 = vadd.f32 %v34, %v112
  %v114 = vpop.f32.mrb[0].mxu0
  %v115 = vpop.f32.mrb[0].mxu0
  %v116 = vpop.f32.mrb[0].mxu0
  %117 = vdwg.mxu0
  %v118 = vmax.f32 %v105, 0.0
  %v119 = vmax.f32 %v108, 0.0
  %v120 = vmax.f32 %v113, 0.0
  %v121 = vpack.c.bf16 %v119, %v118
  %v122 = vpack.c.bf16 %v120, %v120
  %v123 = vld [vmem:[%s3] sm:$0xf]
  %v124 = vld [vmem:[%s3 + $0x4] sm:$0xf]
  %v125 = vld [vmem:[%s3 + $0x8] sm:$0xf]
  %v126 = vld [vmem:[%s3 + $0xc] sm:$0xf]
  %v127 = vld [vmem:[%s3 + $0x10] sm:$0xf]
  %v128 = vld [vmem:[%s3 + $0x14] sm:$0xf]
  %v129 = vld [vmem:[%s3 + $0x18] sm:$0xf]
  %v130 = vld [vmem:[%s3 + $0x1c] sm:$0xf]
  %v131 = vld [vmem:[%s3 + $0x20] sm:$0xf]
  %v132 = vld [vmem:[%s3 + $0x24] sm:$0xf]
  %v133 = vld [vmem:[%s3 + $0x28] sm:$0xf]
  %v134 = vld [vmem:[%s3 + $0x2c] sm:$0xf]
  %v135 = vld [vmem:[%s3 + $0x30] sm:$0xf]
  %v136 = vld [vmem:[%s3 + $0x34] sm:$0xf]
  %v137 = vld [vmem:[%s3 + $0x38] sm:$0xf]
  %v138 = vld [vmem:[%s3 + $0x3c] sm:$0xf]
  %v139 = vld [vmem:[%s4] sm:$0x1]
  %v141 = vlaneseq
  %v142 = vshrl.u32 %v141, 7
  %v143 = vsub.s32 0, %v142
  %v144 = vrot.slane %v139, %v143
  %v162 = vunpack.c.l.b16 %v123
  %v163 = vunpack.c.l.b16 %v124
  %v164 = vunpack.c.l.b16 %v125
  %v165 = vunpack.c.l.b16 %v126
  %v166 = vunpack.c.l.b16 %v127
  %v167 = vunpack.c.l.b16 %v128
  %v168 = vunpack.c.l.b16 %v129
  %v169 = vunpack.c.l.b16 %v130
  %v170 = vunpack.c.l.b16 %v131
  %v171 = vunpack.c.l.b16 %v132
  %v172 = vunpack.c.l.b16 %v133
  %v173 = vunpack.c.l.b16 %v134
  %v174 = vunpack.c.l.b16 %v135
  %v175 = vunpack.c.l.b16 %v136
  %v176 = vunpack.c.l.b16 %v137
  %v177 = vunpack.c.l.b16 %v138
  %v178 = vpack.c.b16 %v163, %v162
  %v179 = vpack.c.b16 %v165, %v164
  %v180 = vpack.c.b16 %v167, %v166
  %v181 = vpack.c.b16 %v169, %v168
  %v182 = vpack.c.b16 %v171, %v170
  %v183 = vpack.c.b16 %v173, %v172
  %v184 = vpack.c.b16 %v175, %v174
  %v185 = vpack.c.b16 %v177, %v176
  %194 = vmatprep.subr.bf16.mxu0 0
  %195 = vmatpush1.bf16.msra.mxu0 %v178
  %196 = vmatprep.subr.bf16.mxu0 0
  %197 = vmatpush1.bf16.msra.mxu0 %v179
  %198 = vmatprep.subr.bf16.mxu0 0
  %199 = vmatpush1.bf16.msra.mxu0 %v180
  %200 = vmatprep.subr.bf16.mxu0 0
  %201 = vmatpush1.bf16.msra.mxu0 %v181
  %202 = vmatprep.subr.bf16.mxu0 0
  %203 = vmatpush1.bf16.msra.mxu0 %v182
  %204 = vmatprep.subr.bf16.mxu0 0
  %205 = vmatpush1.bf16.msra.mxu0 %v183
  %206 = vmatprep.subr.bf16.mxu0 0
  %207 = vmatpush1.bf16.msra.mxu0 %v184
  %208 = vmatprep.subr.bf16.mxu0 0
  %209 = vmatpush1.bf16.msra.mxu0 %v185
  %210 = vmatprep.subr.bf16.mxu0 0
  %211 = vmatpush1.bf16.msra.mxu0 0
  %212 = vmatprep.subr.bf16.mxu0 0
  %213 = vmatpush1.bf16.msra.mxu0 0
  %214 = vmatprep.subr.bf16.mxu0 0
  %215 = vmatpush1.bf16.msra.mxu0 0
  %216 = vmatprep.subr.bf16.mxu0 0
  %217 = vmatpush1.bf16.msra.mxu0 0
  %218 = vmatprep.subr.bf16.mxu0 0
  %219 = vmatpush1.bf16.msra.mxu0 0
  %220 = vmatprep.subr.bf16.mxu0 0
  %221 = vmatpush1.bf16.msra.mxu0 0
  %222 = vmatprep.subr.bf16.mxu0 0
  %223 = vmatpush1.bf16.msra.mxu0 0
  %224 = vmatprep.subr.bf16.mxu0 0
  %225 = vmatpush1.bf16.msra.mxu0 0
  %226 = vmatprep.mubr.bf16.mxu0 0
  %227 = vmatmul.mubr.bf16.gmra.mrb[0].mxu0 %v121
  %v228 = vpop.f32.mrb[0].mxu0
  %v229 = vadd.f32 %v144, %v228
  %v230 = vpop.f32.mrb[0].mxu0
  %v231 = vpop.f32.mrb[0].mxu0
  %v232 = vadd.f32 %v144, %v231
  %v233 = vpop.f32.mrb[0].mxu0
  %234 = vmatprep.mubr.bf16.mxu0 0
  %235 = vmatmul.mubr.bf16.gmra.mrb[0].mxu0 %v122
  %v236 = vpop.f32.mrb[0].mxu0
  %v237 = vadd.f32 %v144, %v236
  %v238 = vpop.f32.mrb[0].mxu0
  %v239 = vpop.f32.mrb[0].mxu0
  %v240 = vpop.f32.mrb[0].mxu0
  %241 = vdwg.mxu0
  %v242 = vmax.f32 %v229, %v232
  %v243 = vmax.f32 %v242, %v237
  %v244 = vmax.f32 %v243, 0.0
  %245 = vst [vmem:[%s5] sm:$0xff] %v244
  // Predicated region
  $region22: #{_lambda_.3} parent=0 // pred_check
    _
  $region23: #{_lambda_.3} parent=0 // pred_check_branch
    %247 = sbr.rel (0) target = $region25
  $region24: #{_lambda_.3} parent=0 // pred_region
    _
  $region25: #{_lambda_.3} parent=0 // pred_fallthru
    _
  // Predicated region
  $region26: #{_lambda_.3} parent=0 // pred_check
    _
  $region27: #{_lambda_.3} parent=0 // pred_check_branch
    %249 = sbr.rel (0) target = $region29
  $region28: #{_lambda_.3} parent=0 // pred_region
    _
  $region29: #{_lambda_.3} parent=0 // pred_fallthru
    _

// kernel: _lambda_.2
$region0: #{_lambda_.2}
  #allocation0 [shape = 'u32[]', space=smem, size = 0x4, offset = 0x4, fixed_abs, tag = 'smem constant byte address 0x4 - core index']
  #allocation1 [shape = 'u32[144,128]{1,0:T(1,128)}', space=vmem, size = 0x12000, scoped, tag = 'internal scratch']
  %s0 = inlined_call_operand.vmem [shape: bf16[24,8], index: 0, kind: input, shape index: {}]
  %s1 = inlined_call_operand.vmem [shape: bf16[8,128], index: 1, kind: input, shape index: {}]
  %s2 = inlined_call_operand.vmem [shape: f32[1,128], index: 2, kind: input, shape index: {}]
  %s3 = inlined_call_operand.vmem [shape: bf16[128,128], index: 3, kind: input, shape index: {}]
  %s4 = inlined_call_operand.vmem [shape: f32[1,128], index: 4, kind: input, shape index: {}]
  %s5 = inlined_call_operand.vmem [shape: bf16[8,128], index: 5, kind: output, shape index: {}]
  %s6 = sld [smem:[#allocation0]]
  $region30: #{_lambda_.2} parent=0
    _
  %s8 = ssub.s32 1, %s6
  %s9 = scalar_select 0, %s8, %s6
  // Predicated region
  $region2: #{_lambda_.2} parent=0 // pred_check
    _
  $region3: #{_lambda_.2} parent=0 // pred_check_branch
    %11 = sbr.rel (0) target = $region5
  $region4: #{_lambda_.2} parent=0 // pred_region
    _
  $region5: #{_lambda_.2} parent=0 // pred_fallthru
    _
  // Predicated region
  $region6: #{_lambda_.2} parent=0 // pred_check
    _
  $region7: #{_lambda_.2} parent=0 // pred_check_branch
    %13 = sbr.rel (0) target = $region9
  $region8: #{_lambda_.2} parent=0 // pred_region
    _
  $region9: #{_lambda_.2} parent=0 // pred_fallthru
    _
  // Predicated region
  $region10: #{_lambda_.2} parent=0 // pred_check
    _
  $region11: #{_lambda_.2} parent=0 // pred_check_branch
    %15 = sbr.rel (0) target = $region13
  $region12: #{_lambda_.2} parent=0 // pred_region
    _
  $region13: #{_lambda_.2} parent=0 // pred_fallthru
    _
  // Predicated region
  $region14: #{_lambda_.2} parent=0 // pred_check
    _
  $region15: #{_lambda_.2} parent=0 // pred_check_branch
    %17 = sbr.rel (0) target = $region17
  $region16: #{_lambda_.2} parent=0 // pred_region
    _
  $region17: #{_lambda_.2} parent=0 // pred_fallthru
    _
  // Predicated region
  $region18: #{_lambda_.2} parent=0 // pred_check
    _
  $region19: #{_lambda_.2} parent=0 // pred_check_branch
    %19 = sbr.rel (0) target = $region21
  $region20: #{_lambda_.2} parent=0 // pred_region
    _
  $region21: #{_lambda_.2} parent=0 // pred_fallthru
    _
  %v21 = vld [vmem:[%s0] sm:$0xf]
  %v22 = vld [vmem:[%s0 + $0x4] sm:$0xf]
  %v23 = vld [vmem:[%s0 + $0x8] sm:$0xf]
  %v24 = vld [vmem:[%s1] sm:$0xf]
  %v25 = vld [vmem:[%s2] sm:$0x1]
  %v27 = vlaneseq
  %v28 = vshrl.u32 %v27, 7
  %v29 = vsub.s32 0, %v28
  %v30 = vrot.slane %v25, %v29
  %v35 = vunpack.c.l.b16 %v21
  %v36 = vunpack.c.l.b16 %v22
  %v37 = vunpack.c.l.b16 %v23
  %v38 = vpack.c.b16 %v36, %v35
  %v39 = vpack.c.b16 %v37, %v37
  %vm40 = vcmask 64512
  %v42 = vsel %vm40, %v38, 0
  %v45 = vsel %vm40, %v39, 0
  %vm47 = vcmask 1043456
  %v49 = vsel %vm47, %v24, 0
  %51 = vmatprep.subr.bf16.mxu0 0
  %52 = vmatpush1.bf16.msra.mxu0 %v49
  %53 = vmatprep.subr.bf16.mxu0 0
  %54 = vmatpush1.bf16.msra.mxu0 0
  %55 = vmatprep.subr.bf16.mxu0 0
  %56 = vmatpush1.bf16.msra.mxu0 0
  %57 = vmatprep.subr.bf16.mxu0 0
  %58 = vmatpush1.bf16.msra.mxu0 0
  %59 = vmatprep.subr.bf16.mxu0 0
  %60 = vmatpush1.bf16.msra.mxu0 0
  %61 = vmatprep.subr.bf16.mxu0 0
  %62 = vmatpush1.bf16.msra.mxu0 0
  %63 = vmatprep.subr.bf16.mxu0 0
  %64 = vmatpush1.bf16.msra.mxu0 0
  %65 = vmatprep.subr.bf16.mxu0 0
  %66 = vmatpush1.bf16.msra.mxu0 0
  %67 = vmatprep.subr.bf16.mxu0 0
  %68 = vmatpush1.bf16.msra.mxu0 0
  %69 = vmatprep.subr.bf16.mxu0 0
  %70 = vmatpush1.bf16.msra.mxu0 0
  %71 = vmatprep.subr.bf16.mxu0 0
  %72 = vmatpush1.bf16.msra.mxu0 0
  %73 = vmatprep.subr.bf16.mxu0 0
  %74 = vmatpush1.bf16.msra.mxu0 0
  %75 = vmatprep.subr.bf16.mxu0 0
  %76 = vmatpush1.bf16.msra.mxu0 0
  %77 = vmatprep.subr.bf16.mxu0 0
  %78 = vmatpush1.bf16.msra.mxu0 0
  %79 = vmatprep.subr.bf16.mxu0 0
  %80 = vmatpush1.bf16.msra.mxu0 0
  %81 = vmatprep.subr.bf16.mxu0 0
  %82 = vmatpush1.bf16.msra.mxu0 0
  %83 = vmatprep.mubr.bf16.mxu0 0
  %84 = vmatmul.mubr.bf16.gmra.mrb[0].mxu0 %v42
  %v85 = vpop.f32.mrb[0].mxu0
  %v86 = vadd.f32 %v30, %v85
  %v87 = vpop.f32.mrb[0].mxu0
  %v88 = vpop.f32.mrb[0].mxu0
  %v89 = vadd.f32 %v30, %v88
  %v90 = vpop.f32.mrb[0].mxu0
  %91 = vmatprep.mubr.bf16.mxu0 0
  %92 = vmatmul.mubr.bf16.gmra.mrb[0].mxu0 %v45
  %v93 = vpop.f32.mrb[0].mxu0
  %v94 = vadd.f32 %v30, %v93
  %v95 = vpop.f32.mrb[0].mxu0
  %v96 = vpop.f32.mrb[0].mxu0
  %v97 = vpop.f32.mrb[0].mxu0
  %98 = vdwg.mxu0
  %v99 = vmax.f32 %v86, 0.0
  %v100 = vmax.f32 %v89, 0.0
  %v101 = vmax.f32 %v94, 0.0
  %v102 = vpack.c.bf16 %v100, %v99
  %v103 = vpack.c.bf16 %v101, %v101
  %v104 = vld [vmem:[%s3] sm:$0xf]
  %v105 = vld [vmem:[%s3 + $0x4] sm:$0xf]
  %v106 = vld [vmem:[%s3 + $0x8] sm:$0xf]
  %v107 = vld [vmem:[%s3 + $0xc] sm:$0xf]
  %v108 = vld [vmem:[%s3 + $0x10] sm:$0xf]
  %v109 = vld [vmem:[%s3 + $0x14] sm:$0xf]
  %v110 = vld [vmem:[%s3 + $0x18] sm:$0xf]
  %v111 = vld [vmem:[%s3 + $0x1c] sm:$0xf]
  %v112 = vld [vmem:[%s3 + $0x20] sm:$0xf]
  %v113 = vld [vmem:[%s3 + $0x24] sm:$0xf]
  %v114 = vld [vmem:[%s3 + $0x28] sm:$0xf]
  %v115 = vld [vmem:[%s3 + $0x2c] sm:$0xf]
  %v116 = vld [vmem:[%s3 + $0x30] sm:$0xf]
  %v117 = vld [vmem:[%s3 + $0x34] sm:$0xf]
  %v118 = vld [vmem:[%s3 + $0x38] sm:$0xf]
  %v119 = vld [vmem:[%s3 + $0x3c] sm:$0xf]
  %v120 = vld [vmem:[%s4] sm:$0x1]
  %v122 = vlaneseq
  %v123 = vshrl.u32 %v122, 7
  %v124 = vsub.s32 0, %v123
  %v125 = vrot.slane %v120, %v124
  %v143 = vunpack.c.l.b16 %v104
  %v144 = vunpack.c.l.b16 %v105
  %v145 = vunpack.c.l.b16 %v106
  %v146 = vunpack.c.l.b16 %v107
  %v147 = vunpack.c.l.b16 %v108
  %v148 = vunpack.c.l.b16 %v109
  %v149 = vunpack.c.l.b16 %v110
  %v150 = vunpack.c.l.b16 %v111
  %v151 = vunpack.c.l.b16 %v112
  %v152 = vunpack.c.l.b16 %v113
  %v153 = vunpack.c.l.b16 %v114
  %v154 = vunpack.c.l.b16 %v115
  %v155 = vunpack.c.l.b16 %v116
  %v156 = vunpack.c.l.b16 %v117
  %v157 = vunpack.c.l.b16 %v118
  %v158 = vunpack.c.l.b16 %v119
  %v159 = vpack.c.b16 %v144, %v143
  %v160 = vpack.c.b16 %v146, %v145
  %v161 = vpack.c.b16 %v148, %v147
  %v162 = vpack.c.b16 %v150, %v149
  %v163 = vpack.c.b16 %v152, %v151
  %v164 = vpack.c.b16 %v154, %v153
  %v165 = vpack.c.b16 %v156, %v155
  %v166 = vpack.c.b16 %v158, %v157
  %175 = vmatprep.subr.bf16.mxu0 0
  %176 = vmatpush1.bf16.msra.mxu0 %v159
  %177 = vmatprep.subr.bf16.mxu0 0
  %178 = vmatpush1.bf16.msra.mxu0 %v160
  %179 = vmatprep.subr.bf16.mxu0 0
  %180 = vmatpush1.bf16.msra.mxu0 %v161
  %181 = vmatprep.subr.bf16.mxu0 0
  %182 = vmatpush1.bf16.msra.mxu0 %v162
  %183 = vmatprep.subr.bf16.mxu0 0
  %184 = vmatpush1.bf16.msra.mxu0 %v163
  %185 = vmatprep.subr.bf16.mxu0 0
  %186 = vmatpush1.bf16.msra.mxu0 %v164
  %187 = vmatprep.subr.bf16.mxu0 0
  %188 = vmatpush1.bf16.msra.mxu0 %v165
  %189 = vmatprep.subr.bf16.mxu0 0
  %190 = vmatpush1.bf16.msra.mxu0 %v166
  %191 = vmatprep.subr.bf16.mxu0 0
  %192 = vmatpush1.bf16.msra.mxu0 0
  %193 = vmatprep.subr.bf16.mxu0 0
  %194 = vmatpush1.bf16.msra.mxu0 0
  %195 = vmatprep.subr.bf16.mxu0 0
  %196 = vmatpush1.bf16.msra.mxu0 0
  %197 = vmatprep.subr.bf16.mxu0 0
  %198 = vmatpush1.bf16.msra.mxu0 0
  %199 = vmatprep.subr.bf16.mxu0 0
  %200 = vmatpush1.bf16.msra.mxu0 0
  %201 = vmatprep.subr.bf16.mxu0 0
  %202 = vmatpush1.bf16.msra.mxu0 0
  %203 = vmatprep.subr.bf16.mxu0 0
  %204 = vmatpush1.bf16.msra.mxu0 0
  %205 = vmatprep.subr.bf16.mxu0 0
  %206 = vmatpush1.bf16.msra.mxu0 0
  %207 = vmatprep.mubr.bf16.mxu0 0
  %208 = vmatmul.mubr.bf16.gmra.mrb[0].mxu0 %v102
  %v209 = vpop.f32.mrb[0].mxu0
  %v210 = vadd.f32 %v125, %v209
  %v211 = vpop.f32.mrb[0].mxu0
  %v212 = vpop.f32.mrb[0].mxu0
  %v213 = vadd.f32 %v125, %v212
  %v214 = vpop.f32.mrb[0].mxu0
  %215 = vmatprep.mubr.bf16.mxu0 0
  %216 = vmatmul.mubr.bf16.gmra.mrb[0].mxu0 %v103
  %v217 = vpop.f32.mrb[0].mxu0
  %v218 = vadd.f32 %v125, %v217
  %v219 = vpop.f32.mrb[0].mxu0
  %v220 = vpop.f32.mrb[0].mxu0
  %v221 = vpop.f32.mrb[0].mxu0
  %222 = vdwg.mxu0
  %v223 = vmax.f32 %v210, %v213
  %v224 = vmax.f32 %v223, %v218
  %v225 = vmax.f32 %v224, 0.0
  %v226 = vpack.c.bf16 %v225, %v225
  %227 = vst [vmem:[%s5] sm:$0xf] %v226
  // Predicated region
  $region22: #{_lambda_.2} parent=0 // pred_check
    _
  $region23: #{_lambda_.2} parent=0 // pred_check_branch
    %229 = sbr.rel (0) target = $region25
  $region24: #{_lambda_.2} parent=0 // pred_region
    _
  $region25: #{_lambda_.2} parent=0 // pred_fallthru
    _
  // Predicated region
  $region26: #{_lambda_.2} parent=0 // pred_check
    _
  $region27: #{_lambda_.2} parent=0 // pred_check_branch
    %231 = sbr.rel (0) target = $region29
  $region28: #{_lambda_.2} parent=0 // pred_region
    _
  $region29: #{_lambda_.2} parent=0 // pred_fallthru
    _

</llo_original>
